<compile_context>
chip_gen: v6e
topology: v6e:2x2x1
jax: 0.10.0
libtpu: 0.0.40
codegen_flags: <defaults>
</compile_context>

<pallas_src>
import jax
import jax.numpy as jnp
from jax.experimental import pallas as pl
from jax.experimental.pallas import tpu as pltpu


def gauge_nn_kernel(x_ref, wx_ref, bx_ref, w2_ref, b2_ref, w3_ref, b3_ref,
                    f_ref, u_ref):
    x = x_ref[...]                                                  # (n, Bb)
    Bb = x.shape[1]
    hidden = w2_ref.shape[0]
    out = u_ref.shape[0]
    nc = f_ref.shape[0]

    # --- one fused matmul for everything that consumes X0 ---
    #   rows [0:hidden)              -> W1 @ X0 + b1   (MLP layer-1 pre-activation)
    #   rows [hidden:hidden+out)     -> Kw @ X0 + Kb   (interior point U_ip)
    #   rows [hidden+out:+nc)        -> H0 @ X0 + g    (the "g + H0@X0" part of G)
    # (hidden, out, nc are all multiples of 8 -> sublane-aligned slices)
    fused = (jnp.dot(wx_ref[...], x, preferred_element_type=jnp.float32)
             + bx_ref[...])                                         # (hidden+out+nc, Bb)

    h1 = jnp.maximum(fused[0:hidden, :], 0.0)                       # (hidden, Bb)
    u_ip = fused[hidden:hidden + out, :]                            # (out, Bb)
    g_h0x = fused[hidden + out:hidden + out + nc, :]                # (nc, Bb)

    # --- remaining MLP layers (sequential, cannot be fused) ---
    h2 = jnp.maximum(
        jnp.dot(w2_ref[...], h1, preferred_element_type=jnp.float32) + b2_ref[...], 0.0)
    v = jnp.tanh(
        jnp.dot(w3_ref[...], h2, preferred_element_type=jnp.float32) + b3_ref[...])   # (out, Bb)

    # --- single matmul against F for both U_ip and V (concat along lanes) ---
    fuv = jnp.dot(f_ref[...], jnp.concatenate([u_ip, v], axis=1),
                  preferred_element_type=jnp.float32)               # (nc, 2*Bb)
    f_uip = fuv[:, :Bb]
    f_v = fuv[:, Bb:]

    # --- gauge map from unit inf-norm ball onto {u : F u <= G} ---
    G = g_h0x - f_uip                                               # (nc, Bb)
    # TODO(synk): like the PyTorch original, no guard for G <= 0 or gauge == 0.
    ratio = f_v * pl.reciprocal(G, approx=True)                     # EUP recip
    gauge = jnp.max(ratio, axis=0, keepdims=True)                   # (1, Bb) sublane reduce
    v_inf = jnp.max(jnp.abs(v), axis=0, keepdims=True)              # (1, Bb)

    u_ref[...] = v * (v_inf * pl.reciprocal(gauge, approx=True)) + u_ip


def prepare_params(raw_params):
    """One-time parameter prep (hoisted out of the per-call path).

    raw_params use the PyTorch nn.Linear convention: W has shape (out, in).
    Returns (wx_fused, bx_fused, w2, b2_col, w3, b3_col, F).
    """
    w1, b1, w2, b2, w3, b3, Kw, Kb, g, H0, F = raw_params
    wx = jnp.concatenate([w1, Kw, H0], axis=0)                      # (hidden+out+nc, n)
    bx = jnp.concatenate([b1, Kb, g], axis=0)[:, None]              # (hidden+out+nc, 1)
    return (wx, bx, w2, b2[:, None], w3, b3[:, None], F)


def gauge_nn_forward(X0, prepped, *, block_b=128):
    """X0: (n, batch) column-major like PyTorch; returns U: (m*tau, batch)."""
    wx, bx, w2, b2, w3, b3, F = prepped
    n, B = X0.shape
    out_dim = w3.shape[0]

    if B % block_b != 0:
        block_b = B                                   # single full-batch block
    grid = (B // block_b,)

    const = lambda i: (0, 0)                          # weights VMEM-resident across grid
    return pl.pallas_call(
        gauge_nn_kernel,
        out_shape=jax.ShapeDtypeStruct((out_dim, B), jnp.float32),
        grid_spec=pltpu.PrefetchScalarGridSpec(
            num_scalar_prefetch=0,
            grid=grid,
            in_specs=[
                pl.BlockSpec((n, block_b), lambda i: (0, i)),
                pl.BlockSpec(wx.shape, const),
                pl.BlockSpec(bx.shape, const),
                pl.BlockSpec(w2.shape, const),
                pl.BlockSpec(b2.shape, const),
                pl.BlockSpec(w3.shape, const),
                pl.BlockSpec(b3.shape, const),
                pl.BlockSpec(F.shape, const),
            ],
            out_specs=pl.BlockSpec((out_dim, block_b), lambda i: (0, i)),
        ),
        compiler_params=pltpu.CompilerParams(
            dimension_semantics=("parallel",)),       # v7x: split batch over 2 TCs
    )(X0, wx, bx, w2, b2, w3, b3, F)


def gauge_nn_reference(X0, raw_params):
    """Plain-JAX reference mirroring the PyTorch forward, for validation."""
    w1, b1, w2, b2, w3, b3, Kw, Kb, g, H0, F = raw_params
    batch = X0.shape[1]
    o = jnp.ones((1, batch), jnp.float32)
    U_ip = Kw @ X0 + Kb[:, None] @ o
    h1 = jnp.maximum(w1 @ X0 + b1[:, None], 0.0)
    h2 = jnp.maximum(w2 @ h1 + b2[:, None], 0.0)
    V = jnp.tanh(w3 @ h2 + b3[:, None])
    G = g[:, None] @ o + H0 @ X0 - F @ U_ip
    gauge = jnp.max((F @ V) / G, axis=0, keepdims=True)
    v_inf = jnp.max(jnp.abs(V), axis=0, keepdims=True)
    return V * v_inf / gauge + U_ip


if __name__ == "__main__":
    # system sizes implied by the module: n = state dim, hidden, m*tau = output,
    # nc = number of polytope constraint rows (rows of F, g, H0).
    n, hidden, m, tau, nc, batch = 4, 32, 2, 4, 16, 256
    out_dim = m * tau

    key = jax.random.PRNGKey(0)
    ks = jax.random.split(key, 12)
    s = 0.2
    # nn.Linear convention: weight is (out_features, in_features)
    w1 = jax.random.normal(ks[0], (hidden, n), jnp.float32) * s
    b1 = jax.random.normal(ks[1], (hidden,), jnp.float32) * s
    w2 = jax.random.normal(ks[2], (hidden, hidden), jnp.float32) * s
    b2 = jax.random.normal(ks[3], (hidden,), jnp.float32) * s
    w3 = jax.random.normal(ks[4], (out_dim, hidden), jnp.float32) * s
    b3 = jax.random.normal(ks[5], (out_dim,), jnp.float32) * s
    Kw = jax.random.normal(ks[6], (out_dim, n), jnp.float32) * s          # K_weight
    Kb = jax.random.normal(ks[7], (out_dim,), jnp.float32) * s            # K_bias
    H0 = jax.random.normal(ks[8], (nc, n), jnp.float32) * s
    F = jax.random.normal(ks[9], (nc, out_dim), jnp.float32) * s
    # keep g well positive so the interior-point U_ip is strictly feasible (G > 0)
    g = jnp.abs(jax.random.normal(ks[10], (nc,), jnp.float32)) + 5.0
    X0 = jax.random.normal(ks[11], (n, batch), jnp.float32)

    raw_params = (w1, b1, w2, b2, w3, b3, Kw, Kb, g, H0, F)
    prepped = prepare_params(raw_params)          # one-time; not in the call path

    U = gauge_nn_forward(X0, prepped)
    jax.block_until_ready(U)

    U_ref = gauge_nn_reference(X0, raw_params)
    assert U.shape == (out_dim, batch)
    assert bool(jnp.all(jnp.isfinite(U)))
    assert bool(jnp.allclose(U, U_ref, rtol=2e-2, atol=2e-2))
    print("KERNEL_OK")
</pallas_src>

<mosaic_0001>
module attributes {stable_mosaic.version = 11 : i64} {
  func.func @gauge_nn_kernel(%arg0: i32, %arg1: memref<4x128xf32, #tpu.memory_space<vmem>>, %arg2: memref<56x4xf32, #tpu.memory_space<vmem>>, %arg3: memref<56x1xf32, #tpu.memory_space<vmem>>, %arg4: memref<32x32xf32, #tpu.memory_space<vmem>>, %arg5: memref<32x1xf32, #tpu.memory_space<vmem>>, %arg6: memref<8x32xf32, #tpu.memory_space<vmem>>, %arg7: memref<8x1xf32, #tpu.memory_space<vmem>>, %arg8: memref<16x8xf32, #tpu.memory_space<vmem>>, %arg9: memref<8x128xf32, #tpu.memory_space<vmem>>) attributes {dimension_semantics = [#tpu.dimension_semantics<parallel>], iteration_bounds = array<i64: 2>, scalar_prefetch = 0 : i64, scratch_operands = 0 : i64, tpu.core_type = #tpu.core_type<tc>, window_params = [{transform_indices = @transform_0, window_bounds = array<i64: 4, 128>}, {pipeline_mode = #tpu.pipeline_mode<synchronous>, transform_indices = @transform_1, window_bounds = array<i64: 56, 4>}, {pipeline_mode = #tpu.pipeline_mode<synchronous>, transform_indices = @transform_2, window_bounds = array<i64: 56, 1>}, {pipeline_mode = #tpu.pipeline_mode<synchronous>, transform_indices = @transform_3, window_bounds = array<i64: 32, 32>}, {pipeline_mode = #tpu.pipeline_mode<synchronous>, transform_indices = @transform_4, window_bounds = array<i64: 32, 1>}, {pipeline_mode = #tpu.pipeline_mode<synchronous>, transform_indices = @transform_5, window_bounds = array<i64: 8, 32>}, {pipeline_mode = #tpu.pipeline_mode<synchronous>, transform_indices = @transform_6, window_bounds = array<i64: 8, 1>}, {pipeline_mode = #tpu.pipeline_mode<synchronous>, transform_indices = @transform_7, window_bounds = array<i64: 16, 8>}, {transform_indices = @transform_8, window_bounds = array<i64: 8, 128>}]} {
    %c0 = arith.constant 0 : index
    %c0_0 = arith.constant 0 : index
    %0 = vector.load %arg1[%c0, %c0_0] : memref<4x128xf32, #tpu.memory_space<vmem>>, vector<4x128xf32>
    %c0_1 = arith.constant 0 : index
    %c0_2 = arith.constant 0 : index
    %1 = vector.load %arg2[%c0_1, %c0_2] : memref<56x4xf32, #tpu.memory_space<vmem>>, vector<56x4xf32>
    %cst = arith.constant dense<0.000000e+00> : vector<56x128xf32>
    %2 = tpu.matmul %1, %0, %cst {dimension_numbers = #tpu.dot_dimension_numbers<[1], [0], [0], [1], [0, 0, 1, 1], [], []>} : vector<56x4xf32>, vector<4x128xf32>, vector<56x128xf32> -> vector<56x128xf32>
    %c0_3 = arith.constant 0 : index
    %c0_4 = arith.constant 0 : index
    %3 = vector.load %arg3[%c0_3, %c0_4] : memref<56x1xf32, #tpu.memory_space<vmem>>, vector<56x1xf32>
    %4 = vector.broadcast %3 : vector<56x1xf32> to vector<56x128xf32>
    %5 = arith.addf %2, %4 : vector<56x128xf32>
    %6 = vector.extract_strided_slice %5 {offsets = [0, 0], sizes = [32, 128], strides = [1, 1]} : vector<56x128xf32> to vector<32x128xf32>
    %cst_5 = arith.constant 0.000000e+00 : f32
    %7 = vector.broadcast %cst_5 : f32 to vector<32x128xf32>
    %8 = arith.maximumf %6, %7 : vector<32x128xf32>
    %9 = vector.extract_strided_slice %5 {offsets = [32, 0], sizes = [8, 128], strides = [1, 1]} : vector<56x128xf32> to vector<8x128xf32>
    %10 = vector.extract_strided_slice %5 {offsets = [40, 0], sizes = [16, 128], strides = [1, 1]} : vector<56x128xf32> to vector<16x128xf32>
    %c0_6 = arith.constant 0 : index
    %c0_7 = arith.constant 0 : index
    %11 = vector.load %arg4[%c0_6, %c0_7] : memref<32x32xf32, #tpu.memory_space<vmem>>, vector<32x32xf32>
    %cst_8 = arith.constant dense<0.000000e+00> : vector<32x128xf32>
    %12 = tpu.matmul %11, %8, %cst_8 {dimension_numbers = #tpu.dot_dimension_numbers<[1], [0], [0], [1], [0, 0, 1, 1], [], []>} : vector<32x32xf32>, vector<32x128xf32>, vector<32x128xf32> -> vector<32x128xf32>
    %c0_9 = arith.constant 0 : index
    %c0_10 = arith.constant 0 : index
    %13 = vector.load %arg5[%c0_9, %c0_10] : memref<32x1xf32, #tpu.memory_space<vmem>>, vector<32x1xf32>
    %14 = vector.broadcast %13 : vector<32x1xf32> to vector<32x128xf32>
    %15 = arith.addf %12, %14 : vector<32x128xf32>
    %cst_11 = arith.constant 0.000000e+00 : f32
    %16 = vector.broadcast %cst_11 : f32 to vector<32x128xf32>
    %17 = arith.maximumf %15, %16 : vector<32x128xf32>
    %c0_12 = arith.constant 0 : index
    %c0_13 = arith.constant 0 : index
    %18 = vector.load %arg6[%c0_12, %c0_13] : memref<8x32xf32, #tpu.memory_space<vmem>>, vector<8x32xf32>
    %cst_14 = arith.constant dense<0.000000e+00> : vector<8x128xf32>
    %19 = tpu.matmul %18, %17, %cst_14 {dimension_numbers = #tpu.dot_dimension_numbers<[1], [0], [0], [1], [0, 0, 1, 1], [], []>} : vector<8x32xf32>, vector<32x128xf32>, vector<8x128xf32> -> vector<8x128xf32>
    %c0_15 = arith.constant 0 : index
    %c0_16 = arith.constant 0 : index
    %20 = vector.load %arg7[%c0_15, %c0_16] : memref<8x1xf32, #tpu.memory_space<vmem>>, vector<8x1xf32>
    %21 = vector.broadcast %20 : vector<8x1xf32> to vector<8x128xf32>
    %22 = arith.addf %19, %21 : vector<8x128xf32>
    %23 = math.tanh %22 : vector<8x128xf32>
    %c0_17 = arith.constant 0 : index
    %c0_18 = arith.constant 0 : index
    %24 = vector.load %arg8[%c0_17, %c0_18] : memref<16x8xf32, #tpu.memory_space<vmem>>, vector<16x8xf32>
    %25 = tpu.concatenate %9, %23 in 1 : vector<8x128xf32>, vector<8x128xf32> -> vector<8x256xf32>
    %cst_19 = arith.constant dense<0.000000e+00> : vector<16x256xf32>
    %26 = tpu.matmul %24, %25, %cst_19 {dimension_numbers = #tpu.dot_dimension_numbers<[1], [0], [0], [1], [0, 0, 1, 1], [], []>} : vector<16x8xf32>, vector<8x256xf32>, vector<16x256xf32> -> vector<16x256xf32>
    %27 = vector.extract_strided_slice %26 {offsets = [0, 0], sizes = [16, 128], strides = [1, 1]} : vector<16x256xf32> to vector<16x128xf32>
    %28 = vector.extract_strided_slice %26 {offsets = [0, 128], sizes = [16, 128], strides = [1, 1]} : vector<16x256xf32> to vector<16x128xf32>
    %29 = arith.subf %10, %27 : vector<16x128xf32>
    %30 = tpu.reciprocal %29 {approx = true} : vector<16x128xf32> -> vector<16x128xf32>
    %31 = arith.mulf %28, %30 : vector<16x128xf32>
    %cst_20 = arith.constant dense<0xFF800000> : vector<128xf32>
    %32 = vector.multi_reduction <maximumf>, %31, %cst_20 [0] : vector<16x128xf32> to vector<128xf32>
    %33 = vector.shape_cast %32 : vector<128xf32> to vector<1x128xf32>
    %34 = math.absf %23 : vector<8x128xf32>
    %cst_21 = arith.constant dense<0xFF800000> : vector<128xf32>
    %35 = vector.multi_reduction <maximumf>, %34, %cst_21 [0] : vector<8x128xf32> to vector<128xf32>
    %36 = vector.shape_cast %35 : vector<128xf32> to vector<1x128xf32>
    %37 = tpu.reciprocal %33 {approx = true} : vector<1x128xf32> -> vector<1x128xf32>
    %38 = arith.mulf %36, %37 : vector<1x128xf32>
    %39 = vector.broadcast %38 : vector<1x128xf32> to vector<8x128xf32>
    %40 = arith.mulf %23, %39 : vector<8x128xf32>
    %41 = arith.addf %40, %9 : vector<8x128xf32>
    %c0_22 = arith.constant 0 : index
    %c0_23 = arith.constant 0 : index
    %42 = vector.load %arg9[%c0_22, %c0_23] : memref<8x128xf32, #tpu.memory_space<vmem>>, vector<8x128xf32>
    tpu.vector_store %arg9[%c0_22, %c0_23], %41 {strides = array<i32>} : memref<8x128xf32, #tpu.memory_space<vmem>>, vector<8x128xf32>,
    return
  }
  func.func @transform_0(%arg0: i32) -> (i32, i32) {
    %c0_i32 = arith.constant 0 : i32
    %c0_i32_0 = arith.constant 0 : i32
    return %c0_i32, %arg0 : i32, i32
  }
  func.func @transform_1(%arg0: i32) -> (i32, i32) {
    %c0_i32 = arith.constant 0 : i32
    %c0_i32_0 = arith.constant 0 : i32
    %c0_i32_1 = arith.constant 0 : i32
    return %c0_i32, %c0_i32_0 : i32, i32
  }
  func.func @transform_2(%arg0: i32) -> (i32, i32) {
    %c0_i32 = arith.constant 0 : i32
    %c0_i32_0 = arith.constant 0 : i32
    %c0_i32_1 = arith.constant 0 : i32
    return %c0_i32, %c0_i32_0 : i32, i32
  }
  func.func @transform_3(%arg0: i32) -> (i32, i32) {
    %c0_i32 = arith.constant 0 : i32
    %c0_i32_0 = arith.constant 0 : i32
    %c0_i32_1 = arith.constant 0 : i32
    return %c0_i32, %c0_i32_0 : i32, i32
  }
  func.func @transform_4(%arg0: i32) -> (i32, i32) {
    %c0_i32 = arith.constant 0 : i32
    %c0_i32_0 = arith.constant 0 : i32
    %c0_i32_1 = arith.constant 0 : i32
    return %c0_i32, %c0_i32_0 : i32, i32
  }
  func.func @transform_5(%arg0: i32) -> (i32, i32) {
    %c0_i32 = arith.constant 0 : i32
    %c0_i32_0 = arith.constant 0 : i32
    %c0_i32_1 = arith.constant 0 : i32
    return %c0_i32, %c0_i32_0 : i32, i32
  }
  func.func @transform_6(%arg0: i32) -> (i32, i32) {
    %c0_i32 = arith.constant 0 : i32
    %c0_i32_0 = arith.constant 0 : i32
    %c0_i32_1 = arith.constant 0 : i32
    return %c0_i32, %c0_i32_0 : i32, i32
  }
  func.func @transform_7(%arg0: i32) -> (i32, i32) {
    %c0_i32 = arith.constant 0 : i32
    %c0_i32_0 = arith.constant 0 : i32
    %c0_i32_1 = arith.constant 0 : i32
    return %c0_i32, %c0_i32_0 : i32, i32
  }
  func.func @transform_8(%arg0: i32) -> (i32, i32) {
    %c0_i32 = arith.constant 0 : i32
    %c0_i32_0 = arith.constant 0 : i32
    return %c0_i32, %arg0 : i32, i32
  }
}

</mosaic_0001>

<llo_original>
// kernel: tpu_custom_call.1
$region0: #{tpu_custom_call.1}
  #allocation0 [shape = 'u32[]', space=smem, size = 0x4, offset = 0x4, fixed_abs, tag = 'smem constant byte address 0x4 - core index']
  #allocation1 [shape = 'u32[144,128]{1,0:T(1,128)}', space=vmem, size = 0x12000, scoped, tag = 'internal scratch']
  %s0 = inlined_call_operand.vmem [shape: f32[4,256], index: 0, kind: input, shape index: {}]
  %s1 = inlined_call_operand.vmem [shape: f32[56,4], index: 1, kind: input, shape index: {}]
  %s2 = inlined_call_operand.vmem [shape: f32[56,1], index: 2, kind: input, shape index: {}]
  %s3 = inlined_call_operand.vmem [shape: f32[32,32], index: 3, kind: input, shape index: {}]
  %s4 = inlined_call_operand.vmem [shape: f32[32,1], index: 4, kind: input, shape index: {}]
  %s5 = inlined_call_operand.vmem [shape: f32[8,32], index: 5, kind: input, shape index: {}]
  %s6 = inlined_call_operand.vmem [shape: f32[8,1], index: 6, kind: input, shape index: {}]
  %s7 = inlined_call_operand.vmem [shape: f32[16,8], index: 7, kind: input, shape index: {}]
  %s8 = inlined_call_operand.hbm [shape: f32[8,256], index: 8, kind: output, shape index: {}]
  %s9 = sld [smem:[#allocation0]]
  $region65: #{tpu_custom_call.1} parent=0
    _
  %s11 = ssub.s32 1, %s9
  %s12 = scalar_select 0, %s11, %s9
  $region1: #{tpu_custom_call.1} parent=0
    #allocation2 [shape = 'u8[8192]{0}', space=vmem, size = 0x2000, scoped, tag = 'output window, operand 0']
    #allocation3 [shape = 's32[2]{0}', space=sflag, size = 0x8, scoped, tag = 'scoped memory for tpu_custom_call.1']
    %13 = vsyncpa [#allocation3], 0
    %s14 = scalar_lea.sflag [#allocation3], 1
    %15 = vsyncpa %s14, 0
    loop: start=0, step=1, limit=4
    $region2: #{tpu_custom_call.1} parent=1 // loop_pre_header
      _
    $region3: #{tpu_custom_call.1} parent=1 // loop_header
      %s17 = sphi 0, %s21
      %p18 = scmp.ge.s32.totalorder %s17, 4
      %s27 = sphi 0, %s29
      %s30 = sphi 0, %s27
      %s31 = sphi 0, %s30
      %s47 = sphi 0, %s31
      %s51 = sphi 0, %s51
      %s53 = sphi 0, %s51
      %s54 = sphi 0, %s53
      %s68 = sphi 0, %s54
      %s72 = sphi 0, %s72
      %s74 = sphi 0, %s72
      %s75 = sphi 0, %s74
      %s89 = sphi 0, %s75
      %s93 = sphi 0, %s93
      %s95 = sphi 0, %s93
      %s96 = sphi 0, %s95
      %s110 = sphi 0, %s96
      %s114 = sphi 0, %s114
      %s116 = sphi 0, %s114
      %s117 = sphi 0, %s116
      %s131 = sphi 0, %s117
      %s135 = sphi 0, %s135
      %s137 = sphi 0, %s135
      %s138 = sphi 0, %s137
      %s152 = sphi 0, %s138
      %s156 = sphi 0, %s156
      %s158 = sphi 0, %s156
      %s159 = sphi 0, %s158
      %s173 = sphi 0, %s159
      %s177 = sphi 0, %s177
      %s179 = sphi 0, %s177
      %s180 = sphi 0, %s179
      %s194 = sphi 0, %s180
      %s200 = sphi 0, %s202
      %s203 = sphi 0, %s200
      %s204 = sphi 0, %s203
      %s220 = sphi 0, %s204
    $region4: #{tpu_custom_call.1} parent=1 // loop_header_branch
      %20 = sbr.rel (%p18) target = $region8
    $region5: #{tpu_custom_call.1} parent=1 // loop_body
      %s22 = ssub.s32 %s17, 1
      %s23 = ssub.s32 %s17, 2
      %s24 = sadd.s32 %s17, 1
      %s25 = ssub.s32 %s17, %s24
      %p26 = scmp.eq.s32.totalorder %s25, 0
      %s28 = sadd.s32 %s27, 1
      %s29 = scalar_select %p26, %s27, %s28
      %p32 = pneg %p26
      %p33 = scmp.eq.s32.totalorder %s17, 1
      %p34 = por %p32, %p33
      %p35 = scmp.ne.s32.totalorder %s27, %s30
      %p36 = scmp.eq.s32.totalorder %s17, 0
      %p37 = por %p35, %p36
      %p38 = scmp.ne.s32.totalorder %s27, %s30
      %p39 = scmp.eq.s32.totalorder %s22, 1
      %p40 = por %p38, %p39
      %p41 = scmp.ne.s32.totalorder %s30, %s31
      %p42 = scmp.eq.s32.totalorder %s22, 0
      %p43 = por %p41, %p42
      %p44 = scmp.ne.s32.totalorder %s30, %s31
      %p45 = scmp.eq.s32.totalorder %s23, 1
      %p46 = por %p44, %p45
      %p48 = scmp.ne.s32.totalorder %s31, %s47
      %p49 = scmp.eq.s32.totalorder %s23, 0
      %p50 = por %p48, %p49
      %s52 = sadd.s32 %s51, 1
      %p55 = scmp.eq.s32.totalorder %s17, 1
      %p56 = scmp.ne.s32.totalorder %s51, %s53
      %p57 = scmp.eq.s32.totalorder %s17, 0
      %p58 = por %p56, %p57
      %p59 = scmp.ne.s32.totalorder %s51, %s53
      %p60 = scmp.eq.s32.totalorder %s22, 1
      %p61 = por %p59, %p60
      %p62 = scmp.ne.s32.totalorder %s53, %s54
      %p63 = scmp.eq.s32.totalorder %s22, 0
      %p64 = por %p62, %p63
      %p65 = scmp.ne.s32.totalorder %s53, %s54
      %p66 = scmp.eq.s32.totalorder %s23, 1
      %p67 = por %p65, %p66
      %p69 = scmp.ne.s32.totalorder %s54, %s68
      %p70 = scmp.eq.s32.totalorder %s23, 0
      %p71 = por %p69, %p70
      %s73 = sadd.s32 %s72, 1
      %p76 = scmp.eq.s32.totalorder %s17, 1
      %p77 = scmp.ne.s32.totalorder %s72, %s74
      %p78 = scmp.eq.s32.totalorder %s17, 0
      %p79 = por %p77, %p78
      %p80 = scmp.ne.s32.totalorder %s72, %s74
      %p81 = scmp.eq.s32.totalorder %s22, 1
      %p82 = por %p80, %p81
      %p83 = scmp.ne.s32.totalorder %s74, %s75
      %p84 = scmp.eq.s32.totalorder %s22, 0
      %p85 = por %p83, %p84
      %p86 = scmp.ne.s32.totalorder %s74, %s75
      %p87 = scmp.eq.s32.totalorder %s23, 1
      %p88 = por %p86, %p87
      %p90 = scmp.ne.s32.totalorder %s75, %s89
      %p91 = scmp.eq.s32.totalorder %s23, 0
      %p92 = por %p90, %p91
      %s94 = sadd.s32 %s93, 1
      %p97 = scmp.eq.s32.totalorder %s17, 1
      %p98 = scmp.ne.s32.totalorder %s93, %s95
      %p99 = scmp.eq.s32.totalorder %s17, 0
      %p100 = por %p98, %p99
      %p101 = scmp.ne.s32.totalorder %s93, %s95
      %p102 = scmp.eq.s32.totalorder %s22, 1
      %p103 = por %p101, %p102
      %p104 = scmp.ne.s32.totalorder %s95, %s96
      %p105 = scmp.eq.s32.totalorder %s22, 0
      %p106 = por %p104, %p105
      %p107 = scmp.ne.s32.totalorder %s95, %s96
      %p108 = scmp.eq.s32.totalorder %s23, 1
      %p109 = por %p107, %p108
      %p111 = scmp.ne.s32.totalorder %s96, %s110
      %p112 = scmp.eq.s32.totalorder %s23, 0
      %p113 = por %p111, %p112
      %s115 = sadd.s32 %s114, 1
      %p118 = scmp.eq.s32.totalorder %s17, 1
      %p119 = scmp.ne.s32.totalorder %s114, %s116
      %p120 = scmp.eq.s32.totalorder %s17, 0
      %p121 = por %p119, %p120
      %p122 = scmp.ne.s32.totalorder %s114, %s116
      %p123 = scmp.eq.s32.totalorder %s22, 1
      %p124 = por %p122, %p123
      %p125 = scmp.ne.s32.totalorder %s116, %s117
      %p126 = scmp.eq.s32.totalorder %s22, 0
      %p127 = por %p125, %p126
      %p128 = scmp.ne.s32.totalorder %s116, %s117
      %p129 = scmp.eq.s32.totalorder %s23, 1
      %p130 = por %p128, %p129
      %p132 = scmp.ne.s32.totalorder %s117, %s131
      %p133 = scmp.eq.s32.totalorder %s23, 0
      %p134 = por %p132, %p133
      %s136 = sadd.s32 %s135, 1
      %p139 = scmp.eq.s32.totalorder %s17, 1
      %p140 = scmp.ne.s32.totalorder %s135, %s137
      %p141 = scmp.eq.s32.totalorder %s17, 0
      %p142 = por %p140, %p141
      %p143 = scmp.ne.s32.totalorder %s135, %s137
      %p144 = scmp.eq.s32.totalorder %s22, 1
      %p145 = por %p143, %p144
      %p146 = scmp.ne.s32.totalorder %s137, %s138
      %p147 = scmp.eq.s32.totalorder %s22, 0
      %p148 = por %p146, %p147
      %p149 = scmp.ne.s32.totalorder %s137, %s138
      %p150 = scmp.eq.s32.totalorder %s23, 1
      %p151 = por %p149, %p150
      %p153 = scmp.ne.s32.totalorder %s138, %s152
      %p154 = scmp.eq.s32.totalorder %s23, 0
      %p155 = por %p153, %p154
      %s157 = sadd.s32 %s156, 1
      %p160 = scmp.eq.s32.totalorder %s17, 1
      %p161 = scmp.ne.s32.totalorder %s156, %s158
      %p162 = scmp.eq.s32.totalorder %s17, 0
      %p163 = por %p161, %p162
      %p164 = scmp.ne.s32.totalorder %s156, %s158
      %p165 = scmp.eq.s32.totalorder %s22, 1
      %p166 = por %p164, %p165
      %p167 = scmp.ne.s32.totalorder %s158, %s159
      %p168 = scmp.eq.s32.totalorder %s22, 0
      %p169 = por %p167, %p168
      %p170 = scmp.ne.s32.totalorder %s158, %s159
      %p171 = scmp.eq.s32.totalorder %s23, 1
      %p172 = por %p170, %p171
      %p174 = scmp.ne.s32.totalorder %s159, %s173
      %p175 = scmp.eq.s32.totalorder %s23, 0
      %p176 = por %p174, %p175
      %s178 = sadd.s32 %s177, 1
      %p181 = scmp.eq.s32.totalorder %s17, 1
      %p182 = scmp.ne.s32.totalorder %s177, %s179
      %p183 = scmp.eq.s32.totalorder %s17, 0
      %p184 = por %p182, %p183
      %p185 = scmp.ne.s32.totalorder %s177, %s179
      %p186 = scmp.eq.s32.totalorder %s22, 1
      %p187 = por %p185, %p186
      %p188 = scmp.ne.s32.totalorder %s179, %s180
      %p189 = scmp.eq.s32.totalorder %s22, 0
      %p190 = por %p188, %p189
      %p191 = scmp.ne.s32.totalorder %s179, %s180
      %p192 = scmp.eq.s32.totalorder %s23, 1
      %p193 = por %p191, %p192
      %p195 = scmp.ne.s32.totalorder %s180, %s194
      %p196 = scmp.eq.s32.totalorder %s23, 0
      %p197 = por %p195, %p196
      %s198 = ssub.s32 %s17, %s24
      %p199 = scmp.eq.s32.totalorder %s198, 0
      %s201 = sadd.s32 %s200, 1
      %s202 = scalar_select %p199, %s200, %s201
      %p205 = pneg %p199
      %p206 = scmp.eq.s32.totalorder %s17, 1
      %p207 = por %p205, %p206
      %p208 = scmp.ne.s32.totalorder %s200, %s203
      %p209 = scmp.eq.s32.totalorder %s17, 0
      %p210 = por %p208, %p209
      %p211 = scmp.ne.s32.totalorder %s200, %s203
      %p212 = scmp.eq.s32.totalorder %s22, 1
      %p213 = por %p211, %p212
      %p214 = scmp.ne.s32.totalorder %s203, %s204
      %p215 = scmp.eq.s32.totalorder %s22, 0
      %p216 = por %p214, %p215
      %p217 = scmp.ne.s32.totalorder %s203, %s204
      %p218 = scmp.eq.s32.totalorder %s23, 1
      %p219 = por %p217, %p218
      %p221 = scmp.ne.s32.totalorder %s204, %s220
      %p222 = scmp.eq.s32.totalorder %s23, 0
      %p223 = por %p221, %p222
      %p224 = scmp.le.s32.totalorder 1, %s17
      %p225 = scmp.lt.s32.totalorder %s17, 3
      %p226 = pnand %p224, %p225
      %p227 = pneg %p226
      // Predicated region
      $region9: #{tpu_custom_call.1} parent=5 // pred_check
        _
      $region10: #{tpu_custom_call.1} parent=5 // pred_check_branch
        %229 = sbr.rel (%p226) target = $region12
      $region11: #{tpu_custom_call.1} parent=5 // pred_region
        %s230 = ssub.s32 %s17, 1
        // Predicated region
        $region13: #{tpu_custom_call.1} parent=11 // pred_check
          %p231 = pneg %p64
        $region14: #{tpu_custom_call.1} parent=11 // pred_check_branch
          %233 = sbr.rel (%p231) target = $region16
        $region15: #{tpu_custom_call.1} parent=11 // pred_region
          _
        $region16: #{tpu_custom_call.1} parent=11 // pred_fallthru
          _
        // Predicated region
        $region17: #{tpu_custom_call.1} parent=11 // pred_check
          %p234 = pneg %p85
        $region18: #{tpu_custom_call.1} parent=11 // pred_check_branch
          %236 = sbr.rel (%p234) target = $region20
        $region19: #{tpu_custom_call.1} parent=11 // pred_region
          _
        $region20: #{tpu_custom_call.1} parent=11 // pred_fallthru
          _
        // Predicated region
        $region21: #{tpu_custom_call.1} parent=11 // pred_check
          %p237 = pneg %p106
        $region22: #{tpu_custom_call.1} parent=11 // pred_check_branch
          %239 = sbr.rel (%p237) target = $region24
        $region23: #{tpu_custom_call.1} parent=11 // pred_region
          _
        $region24: #{tpu_custom_call.1} parent=11 // pred_fallthru
          _
        // Predicated region
        $region25: #{tpu_custom_call.1} parent=11 // pred_check
          %p240 = pneg %p127
        $region26: #{tpu_custom_call.1} parent=11 // pred_check_branch
          %242 = sbr.rel (%p240) target = $region28
        $region27: #{tpu_custom_call.1} parent=11 // pred_region
          _
        $region28: #{tpu_custom_call.1} parent=11 // pred_fallthru
          _
        // Predicated region
        $region29: #{tpu_custom_call.1} parent=11 // pred_check
          %p243 = pneg %p148
        $region30: #{tpu_custom_call.1} parent=11 // pred_check_branch
          %245 = sbr.rel (%p243) target = $region32
        $region31: #{tpu_custom_call.1} parent=11 // pred_region
          _
        $region32: #{tpu_custom_call.1} parent=11 // pred_fallthru
          _
        // Predicated region
        $region33: #{tpu_custom_call.1} parent=11 // pred_check
          %p246 = pneg %p169
        $region34: #{tpu_custom_call.1} parent=11 // pred_check_branch
          %248 = sbr.rel (%p246) target = $region36
        $region35: #{tpu_custom_call.1} parent=11 // pred_region
          _
        $region36: #{tpu_custom_call.1} parent=11 // pred_fallthru
          _
        // Predicated region
        $region37: #{tpu_custom_call.1} parent=11 // pred_check
          %p249 = pneg %p190
        $region38: #{tpu_custom_call.1} parent=11 // pred_check_branch
          %251 = sbr.rel (%p249) target = $region40
        $region39: #{tpu_custom_call.1} parent=11 // pred_region
          _
        $region40: #{tpu_custom_call.1} parent=11 // pred_fallthru
          _
      $region12: #{tpu_custom_call.1} parent=5 // pred_fallthru
        _
      %p252 = scmp.lt.s32.totalorder %s17, 2
      // Predicated region
      $region41: #{tpu_custom_call.1} parent=5 // pred_check
        %p253 = pneg %p252
      $region42: #{tpu_custom_call.1} parent=5 // pred_check_branch
        %255 = sbr.rel (%p253) target = $region44
      $region43: #{tpu_custom_call.1} parent=5 // pred_region
        // Predicated region
        $region45: #{tpu_custom_call.1} parent=43 // pred_check
          %p256 = pneg %p37
        $region46: #{tpu_custom_call.1} parent=43 // pred_check_branch
          %258 = sbr.rel (%p256) target = $region48
        $region47: #{tpu_custom_call.1} parent=43 // pred_region
          %p259 = scmp.lt.s32.totalorder %s17, 1
          %s260 = scalar_select %p259, %s17, 1
          %s261 = smul.addr %s260, 4
          %s262 = scalar_lea.vmem %s0, %s261
        $region48: #{tpu_custom_call.1} parent=43 // pred_fallthru
          _
      $region44: #{tpu_custom_call.1} parent=5 // pred_fallthru
        _
      %p263 = scmp.le.s32.totalorder 1, %s17
      %p264 = scmp.lt.s32.totalorder %s17, 3
      %p265 = pnand %p263, %p264
      %p266 = pneg %p265
      // Predicated region
      $region49: #{tpu_custom_call.1} parent=5 // pred_check
        _
      $region50: #{tpu_custom_call.1} parent=5 // pred_check_branch
        %268 = sbr.rel (%p265) target = $region52
      $region51: #{tpu_custom_call.1} parent=5 // pred_region
        %s269 = ssub.s32 %s17, 1
        %p270 = scmp.lt.s32.totalorder %s22, 1
        %s271 = scalar_select %p270, %s22, 1
        %s272 = smul.addr %s271, 4
        %s273 = scalar_lea.vmem %s0, %s272
        %p274 = pneg %p43
        %p275 = pneg %p40
        %p276 = pneg %p64
        %p277 = pneg %p61
        %p278 = pneg %p85
        %p279 = pneg %p82
        %p280 = pneg %p106
        %p281 = pneg %p103
        %p282 = pneg %p127
        %p283 = pneg %p124
        %p284 = pneg %p148
        %p285 = pneg %p145
        %p286 = pneg %p169
        %p287 = pneg %p166
        %p288 = pneg %p190
        %p289 = pneg %p187
        %p290 = pneg %p216
        %p291 = pneg %p213
        %s292 = sand.u32 %s203, 1
        %s293 = scalar_lea.sflag [#allocation3], %s292
        %s294 = sand.u32 %s203, 1
        %s295 = smul.addr %s294, 8
        %s296 = scalar_lea.vmem [#allocation2], %s295
        %p297 = scmp.lt.s32.totalorder %s22, 1
        %s298 = scalar_select %p297, %s22, 1
        %s299 = smul.addr %s298, 4
        %s300 = scalar_lea.vmem %s0, %s299
        %v301 = vld [vmem:[%s300] sm:$0xf]
        %v302 = vld [vmem:[%s1] sm:$0xff]
        %v303 = vld [vmem:[%s1 + $0x8] sm:$0xff]
        %v304 = vld [vmem:[%s1 + $0x10] sm:$0xff]
        %v305 = vld [vmem:[%s1 + $0x18] sm:$0xff]
        %v306 = vld [vmem:[%s1 + $0x20] sm:$0xff]
        %v307 = vld [vmem:[%s1 + $0x28] sm:$0xff]
        %v308 = vld [vmem:[%s1 + $0x30] sm:$0xff]
        %v309 = vld [vmem:[%s2] sm:$0xff]
        %v310 = vld [vmem:[%s2 + $0x8] sm:$0xff]
        %v311 = vld [vmem:[%s2 + $0x10] sm:$0xff]
        %v312 = vld [vmem:[%s2 + $0x18] sm:$0xff]
        %v313 = vld [vmem:[%s2 + $0x20] sm:$0xff]
        %v314 = vld [vmem:[%s2 + $0x28] sm:$0xff]
        %v315 = vld [vmem:[%s2 + $0x30] sm:$0xff]
        %317 = vset.pattern.permute.xlu0 0
        %318 = vperm.xlu0 %317, %v309
        %v319 = vpop.permute.xlu0 %318
        %322 = vset.pattern.permute.xlu0 0
        %323 = vperm.xlu0 %322, %v310
        %v324 = vpop.permute.xlu0 %323
        %327 = vset.pattern.permute.xlu0 0
        %328 = vperm.xlu0 %327, %v311
        %v329 = vpop.permute.xlu0 %328
        %332 = vset.pattern.permute.xlu0 0
        %333 = vperm.xlu0 %332, %v312
        %v334 = vpop.permute.xlu0 %333
        %337 = vset.pattern.permute.xlu0 0
        %338 = vperm.xlu0 %337, %v313
        %v339 = vpop.permute.xlu0 %338
        %342 = vset.pattern.permute.xlu0 0
        %343 = vperm.xlu0 %342, %v314
        %v344 = vpop.permute.xlu0 %343
        %347 = vset.pattern.permute.xlu0 0
        %348 = vperm.xlu0 %347, %v315
        %v349 = vpop.permute.xlu0 %348
        %vm351 = vcmask 31744
        %v353 = vsel %vm351, %v302, 0
        %v356 = vsel %vm351, %v303, 0
        %v359 = vsel %vm351, %v304, 0
        %v362 = vsel %vm351, %v305, 0
        %v365 = vsel %vm351, %v306, 0
        %v368 = vsel %vm351, %v307, 0
        %v371 = vsel %vm351, %v308, 0
        %vm373 = vcmask 1043456
        %v375 = vsel %vm373, %v301, 0
        %377 = vmatprep.subr.mxu0 0.0
        %378 = vmatpush1.msra.mxu0 0.0
        %379 = vmatprep.subr.mxu0 0.0
        %380 = vmatpush1.msra.mxu0 0.0
        %381 = vmatprep.subr.mxu0 0.0
        %382 = vmatpush1.msra.mxu0 0.0
        %383 = vmatprep.subr.mxu0 0.0
        %384 = vmatpush1.msra.mxu0 0.0
        %385 = vmatprep.subr.mxu0 0.0
        %386 = vmatpush1.msra.mxu0 0.0
        %387 = vmatprep.subr.mxu0 0.0
        %388 = vmatpush1.msra.mxu0 0.0
        %389 = vmatprep.subr.mxu0 0.0
        %390 = vmatpush1.msra.mxu0 0.0
        %391 = vmatprep.subr.mxu0 0.0
        %392 = vmatpush1.msra.mxu0 0.0
        %393 = vmatprep.subr.mxu0 0.0
        %394 = vmatpush1.msra.mxu0 0.0
        %395 = vmatprep.subr.mxu0 0.0
        %396 = vmatpush1.msra.mxu0 0.0
        %397 = vmatprep.subr.mxu0 0.0
        %398 = vmatpush1.msra.mxu0 0.0
        %399 = vmatprep.subr.mxu0 0.0
        %400 = vmatpush1.msra.mxu0 0.0
        %401 = vmatprep.subr.mxu0 0.0
        %402 = vmatpush1.msra.mxu0 0.0
        %403 = vmatprep.subr.mxu0 0.0
        %404 = vmatpush1.msra.mxu0 0.0
        %405 = vmatprep.subr.mxu0 0.0
        %406 = vmatpush1.msra.mxu0 0.0
        %407 = vmatprep.subr.mxu0 0.0
        %408 = vmatpush1.msra.mxu0 %v375
        %409 = vmatprep.subr.mxu0 0.0
        %410 = vmatpush2.msra.mxu0 0.0
        %411 = vmatprep.subr.mxu0 0.0
        %412 = vmatpush2.msra.mxu0 0.0
        %413 = vmatprep.subr.mxu0 0.0
        %414 = vmatpush2.msra.mxu0 0.0
        %415 = vmatprep.subr.mxu0 0.0
        %416 = vmatpush2.msra.mxu0 0.0
        %417 = vmatprep.subr.mxu0 0.0
        %418 = vmatpush2.msra.mxu0 0.0
        %419 = vmatprep.subr.mxu0 0.0
        %420 = vmatpush2.msra.mxu0 0.0
        %421 = vmatprep.subr.mxu0 0.0
        %422 = vmatpush2.msra.mxu0 0.0
        %423 = vmatprep.subr.mxu0 0.0
        %424 = vmatpush2.msra.mxu0 0.0
        %425 = vmatprep.subr.mxu0 0.0
        %426 = vmatpush2.msra.mxu0 0.0
        %427 = vmatprep.subr.mxu0 0.0
        %428 = vmatpush2.msra.mxu0 0.0
        %429 = vmatprep.subr.mxu0 0.0
        %430 = vmatpush2.msra.mxu0 0.0
        %431 = vmatprep.subr.mxu0 0.0
        %432 = vmatpush2.msra.mxu0 0.0
        %433 = vmatprep.subr.mxu0 0.0
        %434 = vmatpush2.msra.mxu0 0.0
        %435 = vmatprep.subr.mxu0 0.0
        %436 = vmatpush2.msra.mxu0 0.0
        %437 = vmatprep.subr.mxu0 0.0
        %438 = vmatpush2.msra.mxu0 0.0
        %439 = vmatprep.subr.mxu0 0.0
        %440 = vmatpush2.msra.mxu0 0.0
        %441 = vmatprep.mubr.f32.mxu0 0.0
        %442 = vmatmul.mubr.f32.gmra.mxu0 %v353
        %v443 = vpop.f32.mrf.mxu0
        %v444 = vadd.f32 %v319, %v443
        %v445 = vpop.f32.mrf.mxu0
        %446 = vmatprep.mubr.f32.mxu0 0.0
        %447 = vmatmul.mubr.f32.gmra.mxu0 %v356
        %v448 = vpop.f32.mrf.mxu0
        %v449 = vadd.f32 %v324, %v448
        %v450 = vpop.f32.mrf.mxu0
        %451 = vmatprep.mubr.f32.mxu0 0.0
        %452 = vmatmul.mubr.f32.gmra.mxu0 %v359
        %v453 = vpop.f32.mrf.mxu0
        %v454 = vadd.f32 %v329, %v453
        %v455 = vpop.f32.mrf.mxu0
        %456 = vmatprep.mubr.f32.mxu0 0.0
        %457 = vmatmul.mubr.f32.gmra.mxu0 %v362
        %v458 = vpop.f32.mrf.mxu0
        %v459 = vadd.f32 %v334, %v458
        %v460 = vpop.f32.mrf.mxu0
        %461 = vmatprep.mubr.f32.mxu0 0.0
        %462 = vmatmul.mubr.f32.gmra.mxu0 %v365
        %v463 = vpop.f32.mrf.mxu0
        %v464 = vadd.f32 %v339, %v463
        %v465 = vpop.f32.mrf.mxu0
        %466 = vmatprep.mubr.f32.mxu0 0.0
        %467 = vmatmul.mubr.f32.gmra.mxu0 %v368
        %v468 = vpop.f32.mrf.mxu0
        %v469 = vadd.f32 %v344, %v468
        %v470 = vpop.f32.mrf.mxu0
        %471 = vmatprep.mubr.f32.mxu0 0.0
        %472 = vmatmul.mubr.f32.gmra.mxu0 %v371
        %v473 = vpop.f32.mrf.mxu0
        %v474 = vadd.f32 %v349, %v473
        %v475 = vpop.f32.mrf.mxu0
        %476 = vdwg.mxu0
        %v477 = vmax.f32 %v444, 0.0
        %v478 = vmax.f32 %v449, 0.0
        %v479 = vmax.f32 %v454, 0.0
        %v480 = vmax.f32 %v459, 0.0
        %v481 = vld [vmem:[%s3] sm:$0xff]
        %v482 = vld [vmem:[%s3 + $0x8] sm:$0xff]
        %v483 = vld [vmem:[%s3 + $0x10] sm:$0xff]
        %v484 = vld [vmem:[%s3 + $0x18] sm:$0xff]
        %v485 = vld [vmem:[%s4] sm:$0xff]
        %v486 = vld [vmem:[%s4 + $0x8] sm:$0xff]
        %v487 = vld [vmem:[%s4 + $0x10] sm:$0xff]
        %v488 = vld [vmem:[%s4 + $0x18] sm:$0xff]
        %490 = vset.pattern.permute.xlu0 0
        %491 = vperm.xlu0 %490, %v485
        %v492 = vpop.permute.xlu0 %491
        %495 = vset.pattern.permute.xlu0 0
        %496 = vperm.xlu0 %495, %v486
        %v497 = vpop.permute.xlu0 %496
        %500 = vset.pattern.permute.xlu0 0
        %501 = vperm.xlu0 %500, %v487
        %v502 = vpop.permute.xlu0 %501
        %505 = vset.pattern.permute.xlu0 0
        %506 = vperm.xlu0 %505, %v488
        %v507 = vpop.permute.xlu0 %506
        %vm509 = vcmask 261120
        %v511 = vsel %vm509, %v481, 0
        %v514 = vsel %vm509, %v482, 0
        %v517 = vsel %vm509, %v483, 0
        %v520 = vsel %vm509, %v484, 0
        %522 = vmatprep.subr.mxu0 0.0
        %523 = vmatpush1.msra.mxu0 0.0
        %524 = vmatprep.subr.mxu0 0.0
        %525 = vmatpush1.msra.mxu0 0.0
        %526 = vmatprep.subr.mxu0 0.0
        %527 = vmatpush1.msra.mxu0 0.0
        %528 = vmatprep.subr.mxu0 0.0
        %529 = vmatpush1.msra.mxu0 0.0
        %530 = vmatprep.subr.mxu0 0.0
        %531 = vmatpush1.msra.mxu0 0.0
        %532 = vmatprep.subr.mxu0 0.0
        %533 = vmatpush1.msra.mxu0 0.0
        %534 = vmatprep.subr.mxu0 0.0
        %535 = vmatpush1.msra.mxu0 0.0
        %536 = vmatprep.subr.mxu0 0.0
        %537 = vmatpush1.msra.mxu0 0.0
        %538 = vmatprep.subr.mxu0 0.0
        %539 = vmatpush1.msra.mxu0 0.0
        %540 = vmatprep.subr.mxu0 0.0
        %541 = vmatpush1.msra.mxu0 0.0
        %542 = vmatprep.subr.mxu0 0.0
        %543 = vmatpush1.msra.mxu0 0.0
        %544 = vmatprep.subr.mxu0 0.0
        %545 = vmatpush1.msra.mxu0 0.0
        %546 = vmatprep.subr.mxu0 0.0
        %547 = vmatpush1.msra.mxu0 %v480
        %548 = vmatprep.subr.mxu0 0.0
        %549 = vmatpush1.msra.mxu0 %v479
        %550 = vmatprep.subr.mxu0 0.0
        %551 = vmatpush1.msra.mxu0 %v478
        %552 = vmatprep.subr.mxu0 0.0
        %553 = vmatpush1.msra.mxu0 %v477
        %554 = vmatprep.subr.mxu0 0.0
        %555 = vmatpush2.msra.mxu0 0.0
        %556 = vmatprep.subr.mxu0 0.0
        %557 = vmatpush2.msra.mxu0 0.0
        %558 = vmatprep.subr.mxu0 0.0
        %559 = vmatpush2.msra.mxu0 0.0
        %560 = vmatprep.subr.mxu0 0.0
        %561 = vmatpush2.msra.mxu0 0.0
        %562 = vmatprep.subr.mxu0 0.0
        %563 = vmatpush2.msra.mxu0 0.0
        %564 = vmatprep.subr.mxu0 0.0
        %565 = vmatpush2.msra.mxu0 0.0
        %566 = vmatprep.subr.mxu0 0.0
        %567 = vmatpush2.msra.mxu0 0.0
        %568 = vmatprep.subr.mxu0 0.0
        %569 = vmatpush2.msra.mxu0 0.0
        %570 = vmatprep.subr.mxu0 0.0
        %571 = vmatpush2.msra.mxu0 0.0
        %572 = vmatprep.subr.mxu0 0.0
        %573 = vmatpush2.msra.mxu0 0.0
        %574 = vmatprep.subr.mxu0 0.0
        %575 = vmatpush2.msra.mxu0 0.0
        %576 = vmatprep.subr.mxu0 0.0
        %577 = vmatpush2.msra.mxu0 0.0
        %578 = vmatprep.subr.mxu0 0.0
        %579 = vmatpush2.msra.mxu0 0.0
        %580 = vmatprep.subr.mxu0 0.0
        %581 = vmatpush2.msra.mxu0 0.0
        %582 = vmatprep.subr.mxu0 0.0
        %583 = vmatpush2.msra.mxu0 0.0
        %584 = vmatprep.subr.mxu0 0.0
        %585 = vmatpush2.msra.mxu0 0.0
        %586 = vmatprep.mubr.f32.mxu0 0.0
        %587 = vmatmul.mubr.f32.gmra.mxu0 %v511
        %v588 = vpop.f32.mrf.mxu0
        %v589 = vadd.f32 %v492, %v588
        %v590 = vpop.f32.mrf.mxu0
        %591 = vmatprep.mubr.f32.mxu0 0.0
        %592 = vmatmul.mubr.f32.gmra.mxu0 %v514
        %v593 = vpop.f32.mrf.mxu0
        %v594 = vadd.f32 %v497, %v593
        %v595 = vpop.f32.mrf.mxu0
        %596 = vmatprep.mubr.f32.mxu0 0.0
        %597 = vmatmul.mubr.f32.gmra.mxu0 %v517
        %v598 = vpop.f32.mrf.mxu0
        %v599 = vadd.f32 %v502, %v598
        %v600 = vpop.f32.mrf.mxu0
        %601 = vmatprep.mubr.f32.mxu0 0.0
        %602 = vmatmul.mubr.f32.gmra.mxu0 %v520
        %v603 = vpop.f32.mrf.mxu0
        %v604 = vadd.f32 %v507, %v603
        %v605 = vpop.f32.mrf.mxu0
        %606 = vdwg.mxu0
        %v607 = vmax.f32 %v589, 0.0
        %v608 = vmax.f32 %v594, 0.0
        %v609 = vmax.f32 %v599, 0.0
        %v610 = vmax.f32 %v604, 0.0
        %v611 = vld [vmem:[%s5] sm:$0xff]
        %v612 = vld [vmem:[%s6] sm:$0xff]
        %614 = vset.pattern.permute.xlu0 0
        %615 = vperm.xlu0 %614, %v612
        %v616 = vpop.permute.xlu0 %615
        %v619 = vsel %vm509, %v611, 0
        %621 = vmatprep.subr.mxu0 0.0
        %622 = vmatpush1.msra.mxu0 0.0
        %623 = vmatprep.subr.mxu0 0.0
        %624 = vmatpush1.msra.mxu0 0.0
        %625 = vmatprep.subr.mxu0 0.0
        %626 = vmatpush1.msra.mxu0 0.0
        %627 = vmatprep.subr.mxu0 0.0
        %628 = vmatpush1.msra.mxu0 0.0
        %629 = vmatprep.subr.mxu0 0.0
        %630 = vmatpush1.msra.mxu0 0.0
        %631 = vmatprep.subr.mxu0 0.0
        %632 = vmatpush1.msra.mxu0 0.0
        %633 = vmatprep.subr.mxu0 0.0
        %634 = vmatpush1.msra.mxu0 0.0
        %635 = vmatprep.subr.mxu0 0.0
        %636 = vmatpush1.msra.mxu0 0.0
        %637 = vmatprep.subr.mxu0 0.0
        %638 = vmatpush1.msra.mxu0 0.0
        %639 = vmatprep.subr.mxu0 0.0
        %640 = vmatpush1.msra.mxu0 0.0
        %641 = vmatprep.subr.mxu0 0.0
        %642 = vmatpush1.msra.mxu0 0.0
        %643 = vmatprep.subr.mxu0 0.0
        %644 = vmatpush1.msra.mxu0 0.0
        %645 = vmatprep.subr.mxu0 0.0
        %646 = vmatpush1.msra.mxu0 %v610
        %647 = vmatprep.subr.mxu0 0.0
        %648 = vmatpush1.msra.mxu0 %v609
        %649 = vmatprep.subr.mxu0 0.0
        %650 = vmatpush1.msra.mxu0 %v608
        %651 = vmatprep.subr.mxu0 0.0
        %652 = vmatpush1.msra.mxu0 %v607
        %653 = vmatprep.subr.mxu0 0.0
        %654 = vmatpush2.msra.mxu0 0.0
        %655 = vmatprep.subr.mxu0 0.0
        %656 = vmatpush2.msra.mxu0 0.0
        %657 = vmatprep.subr.mxu0 0.0
        %658 = vmatpush2.msra.mxu0 0.0
        %659 = vmatprep.subr.mxu0 0.0
        %660 = vmatpush2.msra.mxu0 0.0
        %661 = vmatprep.subr.mxu0 0.0
        %662 = vmatpush2.msra.mxu0 0.0
        %663 = vmatprep.subr.mxu0 0.0
        %664 = vmatpush2.msra.mxu0 0.0
        %665 = vmatprep.subr.mxu0 0.0
        %666 = vmatpush2.msra.mxu0 0.0
        %667 = vmatprep.subr.mxu0 0.0
        %668 = vmatpush2.msra.mxu0 0.0
        %669 = vmatprep.subr.mxu0 0.0
        %670 = vmatpush2.msra.mxu0 0.0
        %671 = vmatprep.subr.mxu0 0.0
        %672 = vmatpush2.msra.mxu0 0.0
        %673 = vmatprep.subr.mxu0 0.0
        %674 = vmatpush2.msra.mxu0 0.0
        %675 = vmatprep.subr.mxu0 0.0
        %676 = vmatpush2.msra.mxu0 0.0
        %677 = vmatprep.subr.mxu0 0.0
        %678 = vmatpush2.msra.mxu0 0.0
        %679 = vmatprep.subr.mxu0 0.0
        %680 = vmatpush2.msra.mxu0 0.0
        %681 = vmatprep.subr.mxu0 0.0
        %682 = vmatpush2.msra.mxu0 0.0
        %683 = vmatprep.subr.mxu0 0.0
        %684 = vmatpush2.msra.mxu0 0.0
        %685 = vmatprep.mubr.f32.mxu0 0.0
        %686 = vmatmul.mubr.f32.gmra.mxu0 %v619
        %v687 = vpop.f32.mrf.mxu0
        %v688 = vadd.f32 %v616, %v687
        %v689 = vpop.f32.mrf.mxu0
        %690 = vdwg.mxu0
        %v691 = vtanh.pop %v688
        %v692 = vld [vmem:[%s7] sm:$0xff]
        %v693 = vld [vmem:[%s7 + $0x8] sm:$0xff]
        %vm694 = vcmask 64512
        %v696 = vsel %vm694, %v692, 0
        %v699 = vsel %vm694, %v693, 0
        %701 = vmatprep.subr.mxu0 0.0
        %702 = vmatpush1.msra.mxu0 0.0
        %703 = vmatprep.subr.mxu0 0.0
        %704 = vmatpush1.msra.mxu0 0.0
        %705 = vmatprep.subr.mxu0 0.0
        %706 = vmatpush1.msra.mxu0 0.0
        %707 = vmatprep.subr.mxu0 0.0
        %708 = vmatpush1.msra.mxu0 0.0
        %709 = vmatprep.subr.mxu0 0.0
        %710 = vmatpush1.msra.mxu0 0.0
        %711 = vmatprep.subr.mxu0 0.0
        %712 = vmatpush1.msra.mxu0 0.0
        %713 = vmatprep.subr.mxu0 0.0
        %714 = vmatpush1.msra.mxu0 0.0
        %715 = vmatprep.subr.mxu0 0.0
        %716 = vmatpush1.msra.mxu0 0.0
        %717 = vmatprep.subr.mxu0 0.0
        %718 = vmatpush1.msra.mxu0 0.0
        %719 = vmatprep.subr.mxu0 0.0
        %720 = vmatpush1.msra.mxu0 0.0
        %721 = vmatprep.subr.mxu0 0.0
        %722 = vmatpush1.msra.mxu0 0.0
        %723 = vmatprep.subr.mxu0 0.0
        %724 = vmatpush1.msra.mxu0 0.0
        %725 = vmatprep.subr.mxu0 0.0
        %726 = vmatpush1.msra.mxu0 0.0
        %727 = vmatprep.subr.mxu0 0.0
        %728 = vmatpush1.msra.mxu0 0.0
        %729 = vmatprep.subr.mxu0 0.0
        %730 = vmatpush1.msra.mxu0 0.0
        %731 = vmatprep.subr.mxu0 %v691
        %732 = vmatpush1.msra.mxu0 %v464
        %733 = vmatprep.subr.mxu0 0.0
        %734 = vmatpush2.msra.mxu0 0.0
        %735 = vmatprep.subr.mxu0 0.0
        %736 = vmatpush2.msra.mxu0 0.0
        %737 = vmatprep.subr.mxu0 0.0
        %738 = vmatpush2.msra.mxu0 0.0
        %739 = vmatprep.subr.mxu0 0.0
        %740 = vmatpush2.msra.mxu0 0.0
        %741 = vmatprep.subr.mxu0 0.0
        %742 = vmatpush2.msra.mxu0 0.0
        %743 = vmatprep.subr.mxu0 0.0
        %744 = vmatpush2.msra.mxu0 0.0
        %745 = vmatprep.subr.mxu0 0.0
        %746 = vmatpush2.msra.mxu0 0.0
        %747 = vmatprep.subr.mxu0 0.0
        %748 = vmatpush2.msra.mxu0 0.0
        %749 = vmatprep.subr.mxu0 0.0
        %750 = vmatpush2.msra.mxu0 0.0
        %751 = vmatprep.subr.mxu0 0.0
        %752 = vmatpush2.msra.mxu0 0.0
        %753 = vmatprep.subr.mxu0 0.0
        %754 = vmatpush2.msra.mxu0 0.0
        %755 = vmatprep.subr.mxu0 0.0
        %756 = vmatpush2.msra.mxu0 0.0
        %757 = vmatprep.subr.mxu0 0.0
        %758 = vmatpush2.msra.mxu0 0.0
        %759 = vmatprep.subr.mxu0 0.0
        %760 = vmatpush2.msra.mxu0 0.0
        %761 = vmatprep.subr.mxu0 0.0
        %762 = vmatpush2.msra.mxu0 0.0
        %763 = vmatprep.subr.mxu0 0.0
        %764 = vmatpush2.msra.mxu0 0.0
        %765 = vmatprep.mubr.f32.mxu0 0.0
        %766 = vmatmul.mubr.f32.gmra.mxu0 %v696
        %v767 = vpop.f32.mrf.mxu0
        %v768 = vadd.f32 0.0, %v767
        %v769 = vpop.f32.mrf.mxu0
        %v770 = vadd.f32 0.0, %v769
        %771 = vmatprep.mubr.f32.mxu0 0.0
        %772 = vmatmul.mubr.f32.gmra.mxu0 %v699
        %v773 = vpop.f32.mrf.mxu0
        %v774 = vadd.f32 0.0, %v773
        %v775 = vpop.f32.mrf.mxu0
        %v776 = vadd.f32 0.0, %v775
        %777 = vdwg.mxu0
        %v778 = vsub.f32 %v469, %v768
        %v779 = vsub.f32 %v474, %v774
        %v780 = vrcp.pop %v778
        %v781 = vrcp.pop %v779
        %v782 = vmul.f32 %v770, %v780
        %v783 = vmul.f32 %v776, %v781
        %v784 = vmax.f32 %v782, %v783
        %v785 = vrot.slane %v784, 4
        %v786 = vmax.f32 %v784, %v785
        %v787 = vrot.slane %v786, 2
        %v788 = vmax.f32 %v786, %v787
        %v789 = vrot.slane %v788, 1
        %v790 = vmax.f32 %v788, %v789
        %v791 = vand.u32 2147483647, %v691
        %v792 = vrot.slane %v791, 4
        %v793 = vmax.f32 %v791, %v792
        %v794 = vrot.slane %v793, 2
        %v795 = vmax.f32 %v793, %v794
        %v796 = vrot.slane %v795, 1
        %v797 = vmax.f32 %v795, %v796
        %v798 = vrcp.pop %v790
        %v799 = vmul.f32 %v797, %v798
        %v800 = vmul.f32 %v691, %v799
        %v801 = vadd.f32 %v800, %v464
        %802 = vst [vmem:[%s296] sm:$0xff] %v801
        %s803 = sand.u32 %s203, 1
        %s804 = scalar_lea.sflag [#allocation3], %s803
        %s805 = sand.u32 %s203, 1
        %s806 = smul.addr %s805, 8
        %s807 = scalar_lea.vmem [#allocation2], %s806
        // Predicated region
        $region53: #{tpu_custom_call.1} parent=51 // pred_check
          %p808 = pneg %p213
        $region54: #{tpu_custom_call.1} parent=51 // pred_check_branch
          %810 = sbr.rel (%p808) target = $region56
        $region55: #{tpu_custom_call.1} parent=51 // pred_region
          %s812 = ssub.s32 128, 128
          %813 = vsyncadd %s804, %s812
          %s814 = smul.addr %s22, 128
          %s815 = scalar_lea.hbm %s8, %s814
          %s817 = sshll.u32 %s807, 4
          %s818 = int_to_ptr.vmem [resolvable:$true] %s817
          %820 = dma.vmem_to_hbm [thread:$0]  %s818, 128, %s815, %s804
        $region56: #{tpu_custom_call.1} parent=51 // pred_fallthru
          _
      $region52: #{tpu_custom_call.1} parent=5 // pred_fallthru
        _
      %p821 = scmp.le.s32.totalorder 2, %s17
      // Predicated region
      $region57: #{tpu_custom_call.1} parent=5 // pred_check
        %p822 = pneg %p821
      $region58: #{tpu_custom_call.1} parent=5 // pred_check_branch
        %824 = sbr.rel (%p822) target = $region60
      $region59: #{tpu_custom_call.1} parent=5 // pred_region
        %s825 = ssub.s32 %s17, 2
        // Predicated region
        $region61: #{tpu_custom_call.1} parent=59 // pred_check
          %p826 = pneg %p219
        $region62: #{tpu_custom_call.1} parent=59 // pred_check_branch
          %828 = sbr.rel (%p826) target = $region64
        $region63: #{tpu_custom_call.1} parent=59 // pred_region
          %s829 = sand.u32 %s204, 1
          %s830 = scalar_lea.sflag [#allocation3], %s829
          %s831 = sand.u32 %s204, 1
          %s832 = smul.addr %s831, 8
          %s833 = scalar_lea.vmem [#allocation2], %s832
          %834 = dma.done %s830, 128
        $region64: #{tpu_custom_call.1} parent=59 // pred_fallthru
          _
      $region60: #{tpu_custom_call.1} parent=5 // pred_fallthru
        _
    $region6: #{tpu_custom_call.1} parent=1 // loop_footer
      %s21 = sadd.s32 1, %s17
    $region7: #{tpu_custom_call.1} parent=1 // loop_footer_branch
      %16 = sbr.rel target = $region3
    $region8: #{tpu_custom_call.1} parent=1 // loop_exit
      _
    %835 = vsyncpa [#allocation3], 1
    %s836 = scalar_lea.sflag [#allocation3], 1
    %837 = vsyncpa %s836, 1

</llo_original>
